<compile_context>
chip_gen: v5e
topology: v5e:2x2
jax: 0.10.0
libtpu: 0.0.40
codegen_flags: <defaults>
</compile_context>

<pallas_src>
import functools
import math

import jax
import jax.numpy as jnp
from jax import lax
from jax.experimental import pallas as pl
from jax.experimental.pallas import tpu as pltpu


# ----------------------------------------------------------------------------
# Hardware / tiling helpers
# ----------------------------------------------------------------------------
def _vmem_capacity_bytes():
    try:
        cap = getattr(pltpu.get_tpu_info(), "vmem_capacity_bytes", 0)
        if cap and cap > 0:
            return int(cap)
    except Exception:
        pass
    return 64 << 20  # v7x-safe fallback


def _vmem_limit(vmem_cap):
    return int(vmem_cap * 0.9)


def _pair_tile_rows(n, d, itemsize, vmem_cap, requested=None):
    """Row tile for the pair branch: big 256-multiples preferred, VMEM-budgeted."""
    if requested is not None:
        if requested >= n:
            return n
        return max(8, (requested // 8) * 8)
    if n <= 256:
        return n
    # resident s^T (double-buffered) + diag vectors + partial outputs + slack
    fixed = 2 * n * d * itemsize + 16 * n + (4 << 20)
    # double-buffered (tm,D) im tile + diag slice + ~10 live f32 (tm,N) temps
    per_row = 2 * d * itemsize + 8 + 10 * 4 * n
    cap_rows = max((int(vmem_cap * 0.85) - fixed) // max(per_row, 1), 8)
    for tm in (2048, 1024, 512, 256, 128, 64, 32, 16, 8):
        if tm <= cap_rows and tm <= n:
            return tm
    return 8


def _single_tile_rows(n, m, itemsize, vmem_cap, requested=None):
    """Row tile for the single branch: HBM-bound, target >= 4 MiB per block."""
    if requested is not None:
        if requested >= n:
            return n
        return max(8, (requested // 8) * 8)
    if n <= 1024:
        return n
    per_row = m * (2 * itemsize + 3 * 4)  # dbl-buffered input + ~3 f32 temps
    cap_rows = max(int(vmem_cap * 0.6) // max(per_row, 1), 8)
    target_rows = max((4 << 20) // max(m * itemsize, 1), 256)
    tm = min(target_rows, cap_rows, n)
    return max(8, (tm // 8) * 8)


# ----------------------------------------------------------------------------
# Kernel: paired branch (s is not None)
# ----------------------------------------------------------------------------
def _pair_loss_kernel(im_ref, st_ref, dcol_ref, drow_ref,
                      row_lse_ref, col_m_ref, col_s_ref,
                      *, margin, shift, tau, n_rows):
    c = pl.program_id(0)
    j = pl.program_id(1)
    tiles_per_core = pl.num_programs(1)
    tm = im_ref.shape[0]
    n = drow_ref.shape[1]

    inv_tau = 1.0 / tau
    c_shift = math.exp(-shift / tau)                 # post-exp shift factor
    slack = (-shift * inv_tau) if shift < 0.0 else 0.0  # keeps the LSE stable if shift<0

    @pl.when(j == 0)
    def _init():
        # IEEE semantics make the first online-LSE step exact:
        # exp(-inf - finite) == 0, so col_s * exp(m_old - m_new) == 0.
        row_lse_ref[...] = jnp.zeros_like(row_lse_ref)
        col_m_ref[...] = jnp.full(col_m_ref.shape, -jnp.inf, jnp.float32)
        col_s_ref[...] = jnp.zeros_like(col_s_ref)

    # Global (unclamped) tile index; padded / out-of-range rows are masked below.
    g = c * tiles_per_core + j
    row_start = g * tm

    # (tm, N) scores tile on the MXU; s was pre-transposed once in HBM, so this
    # is a plain (tm,D)x(D,N) contraction with no per-step transpose.
    scores = lax.dot_general(im_ref[...], st_ref[...],
                             dimension_numbers=(((1,), (0,)), ((), ())),
                             preferred_element_type=jnp.float32)

    row_i = lax.broadcasted_iota(jnp.int32, (tm, n), 0)
    col_i = lax.broadcasted_iota(jnp.int32, (tm, n), 1)
    eye = col_i == row_i + row_start
    rows_valid = (lax.broadcasted_iota(jnp.int32, (tm, 1), 0) + row_start) < n_rows

    # Shared scaled scores (single mul feeds both softmax directions).
    z = scores if tau == 1.0 else scores * inv_tau

    d1 = dcol_ref[...]                               # (tm, 1) precomputed diag
    d2 = drow_ref[...]                               # (1, N)  precomputed diag
    keep_s = scores >= d1 - margin
    keep_im = scores >= d2 - margin
    # Force the diagonal mask entries analytically (scores[i,i] >= scores[i,i]-margin
    # iff margin >= 0) so a ULP difference between the precomputed diagonal and the
    # MXU scores can never flip them.
    if margin >= 0.0:
        keep_s = jnp.logical_or(keep_s, eye)
        keep_im = jnp.logical_or(keep_im, eye)
    else:
        keep_s = jnp.logical_and(keep_s, jnp.logical_not(eye))
        keep_im = jnp.logical_and(keep_im, jnp.logical_not(eye))

    # --- image->text (row) direction: masked stable LSE, shift folded post-exp
    m_r = jnp.max(z, axis=1, keepdims=True)
    if slack:
        m_r = m_r + slack
    e_r = jnp.exp(z - m_r)
    s_r = jnp.sum(jnp.where(keep_s, e_r, e_r * c_shift), axis=1, keepdims=True)
    lse_r = m_r + jnp.log(s_r)                       # (tm, 1), in cost/tau units
    row_lse_ref[...] += jnp.sum(jnp.where(rows_valid, lse_r, 0.0), keepdims=True)

    # --- text->image (column) direction: online (streaming) stable LSE --------
    z_cols = jnp.where(rows_valid, z, -jnp.inf)      # masked rows never raise the max
    tile_m = jnp.max(z_cols, axis=0, keepdims=True)  # (1, N)
    if slack:
        tile_m = tile_m + slack
    m_old = col_m_ref[...]
    m_new = jnp.maximum(m_old, tile_m)
    e_c = jnp.exp(z - m_new)
    p_c = jnp.where(keep_im, e_c, e_c * c_shift)
    p_c = jnp.where(rows_valid, p_c, 0.0)            # kills padded-row garbage/NaN
    col_s_ref[...] = (col_s_ref[...] * jnp.exp(m_old - m_new)
                      + jnp.sum(p_c, axis=0, keepdims=True))
    col_m_ref[...] = m_new


def _pair_loss(im, s, *, margin, shift, tau, block_rows=None, core_splits=2):
    n, d = im.shape
    itemsize = im.dtype.itemsize
    vmem_cap = _vmem_capacity_bytes()
    tm = _pair_tile_rows(n, d, itemsize, vmem_cap, block_rows)
    n_tiles = pl.cdiv(n, tm)
    num_cores = max(1, min(int(core_splits), n_tiles))   # 2 shards v7x's TCs; near-free serial elsewhere
    tiles_per_core = pl.cdiv(n_tiles, num_cores)

    # Diagonal precomputed outside the kernel (cheap XLA op) -> no resident im copy.
    diag = jnp.sum(im.astype(jnp.float32) * s.astype(jnp.float32), axis=-1)  # (n,)
    diag_col = diag.reshape(n, 1)
    diag_row = diag.reshape(1, n)
    st = jnp.swapaxes(s, 0, 1)                      # one-time HBM transpose -> (D, N)

    def tile_map(c, j):
        return (jnp.minimum(c * tiles_per_core + j, n_tiles - 1), 0)

    kernel = functools.partial(_pair_loss_kernel, margin=margin, shift=shift,
                               tau=tau, n_rows=n)
    # TODO(synk): single-buffer the constant-index residents (s^T, diag_row) via
    # pipeline_mode=pl.Buffered(1) once that path is settled; halves their VMEM.
    grid_spec = pltpu.PrefetchScalarGridSpec(
        num_scalar_prefetch=0,
        grid=(num_cores, tiles_per_core),
        in_specs=[
            pl.BlockSpec((tm, d), tile_map),               # im row tile
            pl.BlockSpec((d, n), lambda c, j: (0, 0)),     # s^T (resident)
            pl.BlockSpec((tm, 1), tile_map),               # diag slice for row masks
            pl.BlockSpec((1, n), lambda c, j: (0, 0)),     # diag row for column masks
        ],
        out_specs=[
            pl.BlockSpec((None, 1, 1), lambda c, j: (c, 0, 0)),   # per-core row-LSE sum
            pl.BlockSpec((None, 1, n), lambda c, j: (c, 0, 0)),   # per-core column max
            pl.BlockSpec((None, 1, n), lambda c, j: (c, 0, 0)),   # per-core column sumexp
        ],
    )
    row_lse_p, col_m_p, col_s_p = pl.pallas_call(
        kernel,
        out_shape=(jax.ShapeDtypeStruct((num_cores, 1, 1), jnp.float32),
                   jax.ShapeDtypeStruct((num_cores, 1, n), jnp.float32),
                   jax.ShapeDtypeStruct((num_cores, 1, n), jnp.float32)),
        grid_spec=grid_spec,
        compiler_params=pltpu.CompilerParams(
            dimension_semantics=("parallel", "arbitrary"),
            vmem_limit_bytes=_vmem_limit(vmem_cap),
        ),
    )(im, st, diag_col, diag_row)

    # Tiny JAX epilogue: merge per-core partials.
    row_lse = jnp.sum(row_lse_p) * tau
    gm = jnp.max(col_m_p, axis=0)                                 # (1, n)
    gs = jnp.sum(col_s_p * jnp.exp(col_m_p - gm), axis=0)          # (1, n)
    col_lse = jnp.sum(gm + jnp.log(gs)) * tau
    dsum = jnp.sum(diag)
    dadj = dsum if margin >= 0.0 else dsum - shift * n            # sum of cost.diag()
    return (row_lse + col_lse - 2.0 * dadj + 2.0 * (margin * n)) / n


# ----------------------------------------------------------------------------
# Kernel: single-argument branch (s is None); `im` is already a score matrix
# ----------------------------------------------------------------------------
def _single_loss_kernel(sc_ref, out_ref, *, margin, max_violation, n_rows):
    c = pl.program_id(0)
    j = pl.program_id(1)
    tm = sc_ref.shape[0]

    @pl.when(j == 0)
    def _init():
        out_ref[...] = jnp.zeros_like(out_ref)

    g = c * pl.num_programs(1) + j
    sc = sc_ref[...].astype(jnp.float32)                 # (tm, M)
    cost = jnp.maximum(sc - sc[:, 0:1] + margin, 0.0)    # clamp(min=0)
    if max_violation:
        cost = jnp.max(cost, axis=1, keepdims=True)
    rows_valid = (lax.broadcasted_iota(jnp.int32, (tm, 1), 0) + g * tm) < n_rows
    cost = jnp.where(rows_valid, cost, 0.0)
    out_ref[...] += jnp.sum(cost, keepdims=True)


def _single_loss(scores, *, margin, max_violation, block_rows=None, core_splits=2):
    n, m = scores.shape
    vmem_cap = _vmem_capacity_bytes()
    tm = _single_tile_rows(n, m, scores.dtype.itemsize, vmem_cap, block_rows)
    n_tiles = pl.cdiv(n, tm)
    num_cores = max(1, min(int(core_splits), n_tiles))
    tiles_per_core = pl.cdiv(n_tiles, num_cores)

    kernel = functools.partial(_single_loss_kernel, margin=margin,
                               max_violation=max_violation, n_rows=n)
    grid_spec = pltpu.PrefetchScalarGridSpec(
        num_scalar_prefetch=0,
        grid=(num_cores, tiles_per_core),
        in_specs=[pl.BlockSpec(
            (tm, m), lambda c, j: (jnp.minimum(c * tiles_per_core + j, n_tiles - 1), 0))],
        out_specs=pl.BlockSpec((None, 1, 1), lambda c, j: (c, 0, 0)),
    )
    out = pl.pallas_call(
        kernel,
        out_shape=jax.ShapeDtypeStruct((num_cores, 1, 1), jnp.float32),
        grid_spec=grid_spec,
        compiler_params=pltpu.CompilerParams(
            dimension_semantics=("parallel", "arbitrary"),
            vmem_limit_bytes=_vmem_limit(vmem_cap),
        ),
    )(scores)
    return jnp.sum(out)


# ----------------------------------------------------------------------------
# Module-like wrapper matching the PyTorch forward()
# ----------------------------------------------------------------------------
class ContrastiveLossPallas:
    def __init__(self, margin=0.0, shift=2.0, measure=False, max_violation=False):
        # TODO(synk): measure == 'order' (order_sim) not implemented; dot-product sim only.
        # TODO(synk): loss_func() helper is unused by forward() and not ported.
        self.margin = float(margin)
        self.shift = float(shift)
        self.max_violation = bool(max_violation)

    def set_margin(self, margin):
        self.margin = float(margin)

    def __call__(self, im, s=None, tau=1.0, lab=None, block_rows=None, core_splits=2):
        if s is None:
            return _single_loss(im, margin=self.margin,
                                max_violation=self.max_violation,
                                block_rows=block_rows, core_splits=core_splits)
        return _pair_loss(im, s, margin=self.margin, shift=self.shift,
                          tau=float(tau), block_rows=block_rows,
                          core_splits=core_splits)


# ----------------------------------------------------------------------------
# Pure-JAX references (correctness check only; mirror the PyTorch math exactly)
# ----------------------------------------------------------------------------
def _ref_pair_loss(im, s, margin, shift, tau):
    scores = im @ s.T
    diag = jnp.diag(scores).reshape(-1, 1)
    mask_s = (scores >= diag - margin).astype(jnp.float32)
    cost_s = scores * mask_s + (1.0 - mask_s) * (scores - shift)
    mask_im = (scores >= diag.T - margin).astype(jnp.float32)
    cost_im = scores * mask_im + (1.0 - mask_im) * (scores - shift)
    t1 = (-jnp.diag(cost_s) + tau * jnp.log(jnp.sum(jnp.exp(cost_s / tau), axis=1)) + margin).mean()
    t2 = (-jnp.diag(cost_im) + tau * jnp.log(jnp.sum(jnp.exp(cost_im / tau), axis=0)) + margin).mean()
    return t1 + t2


def _ref_single_loss(scores, margin, max_violation):
    d1 = scores[:, 0:1]
    cost = jnp.maximum(margin + scores - d1, 0.0)
    if max_violation:
        cost = jnp.max(cost, axis=1)
    return jnp.sum(cost)


if __name__ == "__main__":
    key = jax.random.PRNGKey(0)
    k_im, k_s = jax.random.split(key)

    N, D = 16, 32
    im = jax.random.normal(k_im, (N, D), dtype=jnp.float32) * 0.5
    s = jax.random.normal(k_s, (N, D), dtype=jnp.float32) * 0.5

    checks = []

    # paired branch, explicitly multi-tile (2 row tiles split across the core axis)
    mod = ContrastiveLossPallas(margin=0.0, shift=2.0, max_violation=False)
    got = mod(im, s, tau=1.0, block_rows=8)
    jax.block_until_ready(got)
    checks.append(("pair tau=1", got, _ref_pair_loss(im, s, 0.0, 2.0, 1.0)))

    # paired branch, tau != 1 and nonzero margin (auto tiling, single tile)
    mod2 = ContrastiveLossPallas(margin=0.2, shift=2.0)
    got2 = mod2(im, s, tau=0.5)
    jax.block_until_ready(got2)
    checks.append(("pair tau=0.5", got2, _ref_pair_loss(im, s, 0.2, 2.0, 0.5)))

    # N not a multiple of the row tile -> exercises the cdiv grid + row masking
    N2 = 12
    im2, s2 = im[:N2], s[:N2]
    mod3 = ContrastiveLossPallas(margin=0.1, shift=1.5)
    got3 = mod3(im2, s2, tau=2.0, block_rows=8)
    jax.block_until_ready(got3)
    checks.append(("pair ragged", got3, _ref_pair_loss(im2, s2, 0.1, 1.5, 2.0)))

    # single-argument branch (s is None): `im` acts as a precomputed score matrix
    got4 = mod(im)
    jax.block_until_ready(got4)
    checks.append(("single", got4, _ref_single_loss(im, 0.0, False)))

    mod_mv = ContrastiveLossPallas(margin=0.1, shift=2.0, max_violation=True)
    got5 = mod_mv(im)
    jax.block_until_ready(got5)
    checks.append(("single max_violation", got5, _ref_single_loss(im, 0.1, True)))

    # single branch with ragged rows + explicit tiling
    got6 = mod(im2, block_rows=8)
    jax.block_until_ready(got6)
    checks.append(("single ragged", got6, _ref_single_loss(im2, 0.0, False)))

    for name, got_v, want_v in checks:
        if not bool(jnp.allclose(got_v, want_v, rtol=1e-4, atol=1e-4)):
            raise AssertionError(f"{name}: pallas {got_v} vs ref {want_v}")
    print("KERNEL_OK")
</pallas_src>

<mosaic_0001>
module attributes {stable_mosaic.version = 11 : i64} {
  func.func @_pair_loss_kernel(%arg0: i32, %arg1: i32, %arg2: memref<8x32xf32, #tpu.memory_space<vmem>>, %arg3: memref<32x16xf32, #tpu.memory_space<vmem>>, %arg4: memref<8x1xf32, #tpu.memory_space<vmem>>, %arg5: memref<1x16xf32, #tpu.memory_space<vmem>>, %arg6: memref<1x1x1xf32, #tpu.memory_space<vmem>>, %arg7: memref<1x1x16xf32, #tpu.memory_space<vmem>>, %arg8: memref<1x1x16xf32, #tpu.memory_space<vmem>>) attributes {dimension_semantics = [#tpu.dimension_semantics<parallel>, #tpu.dimension_semantics<arbitrary>], iteration_bounds = array<i64: 2, 1>, scalar_prefetch = 0 : i64, scratch_operands = 0 : i64, tpu.core_type = #tpu.core_type<tc>, window_params = [{transform_indices = @transform_0, window_bounds = array<i64: 8, 32>}, {pipeline_mode = #tpu.pipeline_mode<synchronous>, transform_indices = @transform_1, window_bounds = array<i64: 32, 16>}, {transform_indices = @transform_2, window_bounds = array<i64: 8, 1>}, {pipeline_mode = #tpu.pipeline_mode<synchronous>, transform_indices = @transform_3, window_bounds = array<i64: 1, 16>}, {transform_indices = @transform_4, window_bounds = array<i64: 1, 1, 1>}, {transform_indices = @transform_5, window_bounds = array<i64: 1, 1, 16>}, {transform_indices = @transform_6, window_bounds = array<i64: 1, 1, 16>}]} {
    %c0_i32 = arith.constant 0 : i32
    %0 = arith.cmpi eq, %arg1, %c0_i32 : i32
    %1 = arith.extui %0 : i1 to i32
    %c0_i32_0 = arith.constant 0 : i32
    %2 = arith.cmpi ne, %1, %c0_i32_0 : i32
    scf.if %2 {
      %cst_38 = arith.constant 0.000000e+00 : f32
      %89 = vector.broadcast %cst_38 : f32 to vector<1x1xf32>
      %c0_39 = arith.constant 0 : index
      %c0_40 = arith.constant 0 : index
      %c0_41 = arith.constant 0 : index
      %90 = vector.load %arg6[%c0_39, %c0_40, %c0_41] : memref<1x1x1xf32, #tpu.memory_space<vmem>>, vector<1x1x1xf32>
      %91 = vector.shape_cast %90 : vector<1x1x1xf32> to vector<1x1xf32>
      %92 = vector.shape_cast %89 : vector<1x1xf32> to vector<1x1x1xf32>
      tpu.vector_store %arg6[%c0_39, %c0_40, %c0_41], %92 {strides = array<i32>} : memref<1x1x1xf32, #tpu.memory_space<vmem>>, vector<1x1x1xf32>,
      %cst_42 = arith.constant 0xFF800000 : f32
      %93 = vector.broadcast %cst_42 : f32 to vector<1x16xf32>
      %c0_43 = arith.constant 0 : index
      %c0_44 = arith.constant 0 : index
      %c0_45 = arith.constant 0 : index
      %94 = vector.load %arg7[%c0_43, %c0_44, %c0_45] : memref<1x1x16xf32, #tpu.memory_space<vmem>>, vector<1x1x16xf32>
      %95 = vector.shape_cast %94 : vector<1x1x16xf32> to vector<1x16xf32>
      %96 = vector.shape_cast %93 : vector<1x16xf32> to vector<1x1x16xf32>
      tpu.vector_store %arg7[%c0_43, %c0_44, %c0_45], %96 {strides = array<i32>} : memref<1x1x16xf32, #tpu.memory_space<vmem>>, vector<1x1x16xf32>,
      %cst_46 = arith.constant 0.000000e+00 : f32
      %97 = vector.broadcast %cst_46 : f32 to vector<1x16xf32>
      %c0_47 = arith.constant 0 : index
      %c0_48 = arith.constant 0 : index
      %c0_49 = arith.constant 0 : index
      %98 = vector.load %arg8[%c0_47, %c0_48, %c0_49] : memref<1x1x16xf32, #tpu.memory_space<vmem>>, vector<1x1x16xf32>
      %99 = vector.shape_cast %98 : vector<1x1x16xf32> to vector<1x16xf32>
      %100 = vector.shape_cast %97 : vector<1x16xf32> to vector<1x1x16xf32>
      tpu.vector_store %arg8[%c0_47, %c0_48, %c0_49], %100 {strides = array<i32>} : memref<1x1x16xf32, #tpu.memory_space<vmem>>, vector<1x1x16xf32>,
    } else {
    }
    %c1_i32 = arith.constant 1 : i32
    %3 = arith.muli %arg0, %c1_i32 : i32
    %4 = arith.addi %3, %arg1 : i32
    %c8_i32 = arith.constant 8 : i32
    %5 = arith.muli %4, %c8_i32 : i32
    %c0 = arith.constant 0 : index
    %c0_1 = arith.constant 0 : index
    %6 = vector.load %arg2[%c0, %c0_1] : memref<8x32xf32, #tpu.memory_space<vmem>>, vector<8x32xf32>
    %c0_2 = arith.constant 0 : index
    %c0_3 = arith.constant 0 : index
    %7 = vector.load %arg3[%c0_2, %c0_3] : memref<32x16xf32, #tpu.memory_space<vmem>>, vector<32x16xf32>
    %cst = arith.constant dense<0.000000e+00> : vector<8x16xf32>
    %8 = tpu.matmul %6, %7, %cst {dimension_numbers = #tpu.dot_dimension_numbers<[1], [0], [0], [1], [0, 0, 1, 1], [], []>} : vector<8x32xf32>, vector<32x16xf32>, vector<8x16xf32> -> vector<8x16xf32>
    %9 = tpu.iota {dimensions = array<i32: 0>} : vector<8x16xi32>
    %10 = tpu.iota {dimensions = array<i32: 1>} : vector<8x16xi32>
    %11 = vector.broadcast %5 : i32 to vector<8x16xi32>
    %12 = arith.addi %9, %11 : vector<8x16xi32>
    %13 = arith.cmpi eq, %10, %12 : vector<8x16xi32>
    %14 = tpu.iota {dimensions = array<i32: 0>} : vector<8x1xi32>
    %15 = vector.broadcast %5 : i32 to vector<8x1xi32>
    %16 = arith.addi %14, %15 : vector<8x1xi32>
    %c16_i32 = arith.constant 16 : i32
    %17 = vector.broadcast %c16_i32 : i32 to vector<8x1xi32>
    %18 = arith.cmpi slt, %16, %17 : vector<8x1xi32>
    %c0_4 = arith.constant 0 : index
    %c0_5 = arith.constant 0 : index
    %19 = vector.load %arg4[%c0_4, %c0_5] : memref<8x1xf32, #tpu.memory_space<vmem>>, vector<8x1xf32>
    %c0_6 = arith.constant 0 : index
    %c0_7 = arith.constant 0 : index
    %20 = vector.load %arg5[%c0_6, %c0_7] : memref<1x16xf32, #tpu.memory_space<vmem>>, vector<1x16xf32>
    %cst_8 = arith.constant 0.000000e+00 : f32
    %21 = vector.broadcast %cst_8 : f32 to vector<8x1xf32>
    %22 = arith.subf %19, %21 : vector<8x1xf32>
    %23 = vector.broadcast %22 : vector<8x1xf32> to vector<8x16xf32>
    %24 = arith.cmpf oge, %8, %23 : vector<8x16xf32>
    %cst_9 = arith.constant 0.000000e+00 : f32
    %25 = vector.broadcast %cst_9 : f32 to vector<1x16xf32>
    %26 = arith.subf %20, %25 : vector<1x16xf32>
    %27 = vector.broadcast %26 : vector<1x16xf32> to vector<8x16xf32>
    %28 = arith.cmpf oge, %8, %27 : vector<8x16xf32>
    %29 = arith.ori %24, %13 : vector<8x16xi1>
    %30 = arith.ori %28, %13 : vector<8x16xi1>
    %cst_10 = arith.constant dense<0xFF800000> : vector<8xf32>
    %31 = vector.multi_reduction <maximumf>, %8, %cst_10 [1] : vector<8x16xf32> to vector<8xf32>
    %32 = vector.shape_cast %31 : vector<8xf32> to vector<8x1xf32>
    %33 = vector.broadcast %32 : vector<8x1xf32> to vector<8x16xf32>
    %34 = arith.subf %8, %33 : vector<8x16xf32>
    %35 = math.exp %34 : vector<8x16xf32>
    %cst_11 = arith.constant 0.135335281 : f32
    %36 = vector.broadcast %cst_11 : f32 to vector<8x16xf32>
    %37 = arith.mulf %35, %36 : vector<8x16xf32>
    %38 = arith.select %29, %35, %37 : vector<8x16xi1>, vector<8x16xf32>
    %cst_12 = arith.constant dense<0.000000e+00> : vector<8xf32>
    %39 = vector.multi_reduction <add>, %38, %cst_12 [1] : vector<8x16xf32> to vector<8xf32>
    %40 = vector.shape_cast %39 : vector<8xf32> to vector<8x1xf32>
    %41 = math.log %40 : vector<8x1xf32>
    %42 = arith.addf %32, %41 : vector<8x1xf32>
    %c0_13 = arith.constant 0 : index
    %c0_14 = arith.constant 0 : index
    %c0_15 = arith.constant 0 : index
    %43 = vector.load %arg6[%c0_13, %c0_14, %c0_15] : memref<1x1x1xf32, #tpu.memory_space<vmem>>, vector<1x1x1xf32>
    %44 = vector.shape_cast %43 : vector<1x1x1xf32> to vector<1x1xf32>
    %cst_16 = arith.constant 0.000000e+00 : f32
    %45 = vector.broadcast %cst_16 : f32 to vector<8x1xf32>
    %46 = arith.select %18, %42, %45 : vector<8x1xi1>, vector<8x1xf32>
    %47 = vector.shape_cast %46 : vector<8x1xf32> to vector<1x8x1xf32>
    %cst_17 = arith.constant dense<0.000000e+00> : vector<1xf32>
    %48 = vector.multi_reduction <add>, %47, %cst_17 [1, 2] : vector<1x8x1xf32> to vector<1xf32>
    %49 = vector.shape_cast %48 : vector<1xf32> to vector<1x1x1xf32>
    %50 = vector.extract %49[0, 0, 0] : f32 from vector<1x1x1xf32>
    %51 = vector.broadcast %50 : f32 to vector<1x1xf32>
    %52 = arith.addf %44, %51 : vector<1x1xf32>
    %c0_18 = arith.constant 0 : index
    %c0_19 = arith.constant 0 : index
    %c0_20 = arith.constant 0 : index
    %53 = vector.load %arg6[%c0_18, %c0_19, %c0_20] : memref<1x1x1xf32, #tpu.memory_space<vmem>>, vector<1x1x1xf32>
    %54 = vector.shape_cast %53 : vector<1x1x1xf32> to vector<1x1xf32>
    %55 = vector.shape_cast %52 : vector<1x1xf32> to vector<1x1x1xf32>
    tpu.vector_store %arg6[%c0_18, %c0_19, %c0_20], %55 {strides = array<i32>} : memref<1x1x1xf32, #tpu.memory_space<vmem>>, vector<1x1x1xf32>,
    %cst_21 = arith.constant 0xFF800000 : f32
    %56 = vector.shape_cast %18 : vector<8x1xi1> to vector<8x1xi1>
    %57 = vector.broadcast %56 : vector<8x1xi1> to vector<8x16xi1>
    %58 = vector.broadcast %cst_21 : f32 to vector<8x16xf32>
    %59 = arith.select %57, %8, %58 : vector<8x16xi1>, vector<8x16xf32>
    %cst_22 = arith.constant dense<0xFF800000> : vector<16xf32>
    %60 = vector.multi_reduction <maximumf>, %59, %cst_22 [0] : vector<8x16xf32> to vector<16xf32>
    %61 = vector.shape_cast %60 : vector<16xf32> to vector<1x16xf32>
    %c0_23 = arith.constant 0 : index
    %c0_24 = arith.constant 0 : index
    %c0_25 = arith.constant 0 : index
    %62 = vector.load %arg7[%c0_23, %c0_24, %c0_25] : memref<1x1x16xf32, #tpu.memory_space<vmem>>, vector<1x1x16xf32>
    %63 = vector.shape_cast %62 : vector<1x1x16xf32> to vector<1x16xf32>
    %64 = arith.maximumf %63, %61 : vector<1x16xf32>
    %65 = vector.broadcast %64 : vector<1x16xf32> to vector<8x16xf32>
    %66 = arith.subf %8, %65 : vector<8x16xf32>
    %67 = math.exp %66 : vector<8x16xf32>
    %cst_26 = arith.constant 0.135335281 : f32
    %68 = vector.broadcast %cst_26 : f32 to vector<8x16xf32>
    %69 = arith.mulf %67, %68 : vector<8x16xf32>
    %70 = arith.select %30, %67, %69 : vector<8x16xi1>, vector<8x16xf32>
    %cst_27 = arith.constant 0.000000e+00 : f32
    %71 = vector.shape_cast %18 : vector<8x1xi1> to vector<8x1xi1>
    %72 = vector.broadcast %71 : vector<8x1xi1> to vector<8x16xi1>
    %73 = vector.broadcast %cst_27 : f32 to vector<8x16xf32>
    %74 = arith.select %72, %70, %73 : vector<8x16xi1>, vector<8x16xf32>
    %c0_28 = arith.constant 0 : index
    %c0_29 = arith.constant 0 : index
    %c0_30 = arith.constant 0 : index
    %75 = vector.load %arg8[%c0_28, %c0_29, %c0_30] : memref<1x1x16xf32, #tpu.memory_space<vmem>>, vector<1x1x16xf32>
    %76 = vector.shape_cast %75 : vector<1x1x16xf32> to vector<1x16xf32>
    %77 = arith.subf %63, %64 : vector<1x16xf32>
    %78 = math.exp %77 : vector<1x16xf32>
    %79 = arith.mulf %76, %78 : vector<1x16xf32>
    %cst_31 = arith.constant dense<0.000000e+00> : vector<16xf32>
    %80 = vector.multi_reduction <add>, %74, %cst_31 [0] : vector<8x16xf32> to vector<16xf32>
    %81 = vector.shape_cast %80 : vector<16xf32> to vector<1x16xf32>
    %82 = arith.addf %79, %81 : vector<1x16xf32>
    %c0_32 = arith.constant 0 : index
    %c0_33 = arith.constant 0 : index
    %c0_34 = arith.constant 0 : index
    %83 = vector.load %arg8[%c0_32, %c0_33, %c0_34] : memref<1x1x16xf32, #tpu.memory_space<vmem>>, vector<1x1x16xf32>
    %84 = vector.shape_cast %83 : vector<1x1x16xf32> to vector<1x16xf32>
    %85 = vector.shape_cast %82 : vector<1x16xf32> to vector<1x1x16xf32>
    tpu.vector_store %arg8[%c0_32, %c0_33, %c0_34], %85 {strides = array<i32>} : memref<1x1x16xf32, #tpu.memory_space<vmem>>, vector<1x1x16xf32>,
    %c0_35 = arith.constant 0 : index
    %c0_36 = arith.constant 0 : index
    %c0_37 = arith.constant 0 : index
    %86 = vector.load %arg7[%c0_35, %c0_36, %c0_37] : memref<1x1x16xf32, #tpu.memory_space<vmem>>, vector<1x1x16xf32>
    %87 = vector.shape_cast %86 : vector<1x1x16xf32> to vector<1x16xf32>
    %88 = vector.shape_cast %64 : vector<1x16xf32> to vector<1x1x16xf32>
    tpu.vector_store %arg7[%c0_35, %c0_36, %c0_37], %88 {strides = array<i32>} : memref<1x1x16xf32, #tpu.memory_space<vmem>>, vector<1x1x16xf32>,
    return
  }
  func.func @transform_0(%arg0: i32, %arg1: i32) -> (i32, i32) {
    %c1_i32 = arith.constant 1 : i32
    %0 = arith.muli %arg0, %c1_i32 : i32
    %1 = arith.addi %0, %arg1 : i32
    %c1_i32_0 = arith.constant 1 : i32
    %2 = arith.minsi %1, %c1_i32_0 : i32
    %c0_i32 = arith.constant 0 : i32
    %c0_i32_1 = arith.constant 0 : i32
    return %2, %c0_i32 : i32, i32
  }
  func.func @transform_1(%arg0: i32, %arg1: i32) -> (i32, i32) {
    %c0_i32 = arith.constant 0 : i32
    %c0_i32_0 = arith.constant 0 : i32
    %c0_i32_1 = arith.constant 0 : i32
    return %c0_i32, %c0_i32_0 : i32, i32
  }
  func.func @transform_2(%arg0: i32, %arg1: i32) -> (i32, i32) {
    %c1_i32 = arith.constant 1 : i32
    %0 = arith.muli %arg0, %c1_i32 : i32
    %1 = arith.addi %0, %arg1 : i32
    %c1_i32_0 = arith.constant 1 : i32
    %2 = arith.minsi %1, %c1_i32_0 : i32
    %c0_i32 = arith.constant 0 : i32
    %c0_i32_1 = arith.constant 0 : i32
    return %2, %c0_i32 : i32, i32
  }
  func.func @transform_3(%arg0: i32, %arg1: i32) -> (i32, i32) {
    %c0_i32 = arith.constant 0 : i32
    %c0_i32_0 = arith.constant 0 : i32
    %c0_i32_1 = arith.constant 0 : i32
    return %c0_i32, %c0_i32_0 : i32, i32
  }
  func.func @transform_4(%arg0: i32, %arg1: i32) -> (i32, i32, i32) {
    %c0_i32 = arith.constant 0 : i32
    %c0_i32_0 = arith.constant 0 : i32
    %c0_i32_1 = arith.constant 0 : i32
    return %arg0, %c0_i32, %c0_i32_0 : i32, i32, i32
  }
  func.func @transform_5(%arg0: i32, %arg1: i32) -> (i32, i32, i32) {
    %c0_i32 = arith.constant 0 : i32
    %c0_i32_0 = arith.constant 0 : i32
    %c0_i32_1 = arith.constant 0 : i32
    return %arg0, %c0_i32, %c0_i32_0 : i32, i32, i32
  }
  func.func @transform_6(%arg0: i32, %arg1: i32) -> (i32, i32, i32) {
    %c0_i32 = arith.constant 0 : i32
    %c0_i32_0 = arith.constant 0 : i32
    %c0_i32_1 = arith.constant 0 : i32
    return %arg0, %c0_i32, %c0_i32_0 : i32, i32, i32
  }
}

</mosaic_0001>

<llo_original>
// kernel: tpu_custom_call.1
$region0: #{tpu_custom_call.1}
  #allocation0 [shape = 'u32[]', space=smem, size = 0x4, offset = 0x4, fixed_abs, tag = 'smem constant byte address 0x4 - core index']
  #allocation1 [shape = 'u32[72,128]{1,0:T(1,128)}', space=vmem, size = 0x9000, scoped, tag = 'internal scratch']
  %s0 = inlined_call_operand.vmem [shape: f32[16,32], index: 0, kind: input, shape index: {}]
  %s1 = inlined_call_operand.vmem [shape: f32[32,16], index: 1, kind: input, shape index: {}]
  %s2 = inlined_call_operand.vmem [shape: f32[16,1], index: 2, kind: input, shape index: {}]
  %s3 = inlined_call_operand.vmem [shape: f32[1,16], index: 3, kind: input, shape index: {}]
  %s4 = inlined_call_operand.vmem [shape: f32[2,1,1], index: 4, kind: output, shape index: {0}]
  %s5 = inlined_call_operand.hbm [shape: f32[2,1,16], index: 5, kind: output, shape index: {1}]
  %s6 = inlined_call_operand.hbm [shape: f32[2,1,16], index: 6, kind: output, shape index: {2}]
  %7 = xla_tuple %s4, %s5, %s6
  %s8 = sld [smem:[#allocation0]]
  $region69: #{tpu_custom_call.1} parent=0
    _
  %s10 = ssub.s32 1, %s8
  %s11 = scalar_select 0, %s10, %s8
  $region1: #{tpu_custom_call.1} parent=0
    #allocation2 [shape = 'u8[1024]{0}', space=vmem, size = 0x400, scoped, tag = 'output window, operand 1']
    #allocation3 [shape = 's32[2]{0}', space=sflag, size = 0x8, scoped, tag = 'scoped memory for tpu_custom_call.1']
    #allocation4 [shape = 'u8[1024]{0}', space=vmem, size = 0x400, scoped, tag = 'output window, operand 2']
    #allocation5 [shape = 's32[2]{0}', space=sflag, size = 0x8, scoped, tag = 'scoped memory for tpu_custom_call.1']
    %12 = vsyncpa [#allocation3], 0
    %s13 = scalar_lea.sflag [#allocation3], 1
    %14 = vsyncpa %s13, 0
    %15 = vsyncpa [#allocation5], 0
    %s16 = scalar_lea.sflag [#allocation5], 1
    %17 = vsyncpa %s16, 0
    loop: start=0, step=1, limit=4
    $region2: #{tpu_custom_call.1} parent=1 // loop_pre_header
      _
    $region3: #{tpu_custom_call.1} parent=1 // loop_header
      %s19 = sphi 0, %s23
      %p20 = scmp.ge.s32.totalorder %s19, 4
      %s26 = sphi 0, %s38
      %s27 = sphi 0, %s34
      %s28 = sphi 0, %s26
      %s29 = sphi 0, %s27
      %s30 = sphi 0, %s28
      %s31 = sphi 0, %s29
      %s47 = sphi 0, %s49
      %s50 = sphi 0, %s47
      %s51 = sphi 0, %s50
      %s67 = sphi 0, %s51
      %s71 = sphi 0, %s71
      %s73 = sphi 0, %s71
      %s74 = sphi 0, %s73
      %s88 = sphi 0, %s74
      %s100 = sphi 0, %s102
      %s103 = sphi 0, %s100
      %s104 = sphi 0, %s103
      %s120 = sphi 0, %s104
      %s124 = sphi 0, %s124
      %s126 = sphi 0, %s124
      %s127 = sphi 0, %s126
      %s141 = sphi 0, %s127
      %s147 = sphi 0, %s149
      %s150 = sphi 0, %s147
      %s151 = sphi 0, %s150
      %s167 = sphi 0, %s151
      %s173 = sphi 0, %s175
      %s176 = sphi 0, %s173
      %s177 = sphi 0, %s176
      %s193 = sphi 0, %s177
      %s199 = sphi 0, %s201
      %s202 = sphi 0, %s199
      %s203 = sphi 0, %s202
      %s219 = sphi 0, %s203
    $region4: #{tpu_custom_call.1} parent=1 // loop_header_branch
      %22 = sbr.rel (%p20) target = $region8
    $region5: #{tpu_custom_call.1} parent=1 // loop_body
      %s24 = ssub.s32 %s19, 1
      %s25 = ssub.s32 %s19, 2
      %s32 = sadd.s32 1, %s27
      %p33 = scmp.ge.s32.totalorder %s32, 1
      %s34 = scalar_select %p33, 0, %s32
      %s35 = sadd.s32 1, %s26
      %s36 = scalar_select %p33, %s35, %s26
      %p37 = scmp.ge.s32.totalorder %s36, 2
      %s38 = scalar_select %p37, 0, %s36
      %s39 = sadd.s32 %s26, %s27
      %p40 = scmp.lt.s32.totalorder %s39, 1
      %s41 = scalar_select %p40, %s39, 1
      %s42 = sadd.s32 %s38, %s34
      %p43 = scmp.lt.s32.totalorder %s42, 1
      %s44 = scalar_select %p43, %s42, 1
      %s45 = ssub.s32 %s41, %s44
      %p46 = scmp.eq.s32.totalorder %s45, 0
      %s48 = sadd.s32 %s47, 1
      %s49 = scalar_select %p46, %s47, %s48
      %p52 = pneg %p46
      %p53 = scmp.eq.s32.totalorder %s19, 1
      %p54 = por %p52, %p53
      %p55 = scmp.ne.s32.totalorder %s47, %s50
      %p56 = scmp.eq.s32.totalorder %s19, 0
      %p57 = por %p55, %p56
      %p58 = scmp.ne.s32.totalorder %s47, %s50
      %p59 = scmp.eq.s32.totalorder %s24, 1
      %p60 = por %p58, %p59
      %p61 = scmp.ne.s32.totalorder %s50, %s51
      %p62 = scmp.eq.s32.totalorder %s24, 0
      %p63 = por %p61, %p62
      %p64 = scmp.ne.s32.totalorder %s50, %s51
      %p65 = scmp.eq.s32.totalorder %s25, 1
      %p66 = por %p64, %p65
      %p68 = scmp.ne.s32.totalorder %s51, %s67
      %p69 = scmp.eq.s32.totalorder %s25, 0
      %p70 = por %p68, %p69
      %s72 = sadd.s32 %s71, 1
      %p75 = scmp.eq.s32.totalorder %s19, 1
      %p76 = scmp.ne.s32.totalorder %s71, %s73
      %p77 = scmp.eq.s32.totalorder %s19, 0
      %p78 = por %p76, %p77
      %p79 = scmp.ne.s32.totalorder %s71, %s73
      %p80 = scmp.eq.s32.totalorder %s24, 1
      %p81 = por %p79, %p80
      %p82 = scmp.ne.s32.totalorder %s73, %s74
      %p83 = scmp.eq.s32.totalorder %s24, 0
      %p84 = por %p82, %p83
      %p85 = scmp.ne.s32.totalorder %s73, %s74
      %p86 = scmp.eq.s32.totalorder %s25, 1
      %p87 = por %p85, %p86
      %p89 = scmp.ne.s32.totalorder %s74, %s88
      %p90 = scmp.eq.s32.totalorder %s25, 0
      %p91 = por %p89, %p90
      %s92 = sadd.s32 %s26, %s27
      %p93 = scmp.lt.s32.totalorder %s92, 1
      %s94 = scalar_select %p93, %s92, 1
      %s95 = sadd.s32 %s38, %s34
      %p96 = scmp.lt.s32.totalorder %s95, 1
      %s97 = scalar_select %p96, %s95, 1
      %s98 = ssub.s32 %s94, %s97
      %p99 = scmp.eq.s32.totalorder %s98, 0
      %s101 = sadd.s32 %s100, 1
      %s102 = scalar_select %p99, %s100, %s101
      %p105 = pneg %p99
      %p106 = scmp.eq.s32.totalorder %s19, 1
      %p107 = por %p105, %p106
      %p108 = scmp.ne.s32.totalorder %s100, %s103
      %p109 = scmp.eq.s32.totalorder %s19, 0
      %p110 = por %p108, %p109
      %p111 = scmp.ne.s32.totalorder %s100, %s103
      %p112 = scmp.eq.s32.totalorder %s24, 1
      %p113 = por %p111, %p112
      %p114 = scmp.ne.s32.totalorder %s103, %s104
      %p115 = scmp.eq.s32.totalorder %s24, 0
      %p116 = por %p114, %p115
      %p117 = scmp.ne.s32.totalorder %s103, %s104
      %p118 = scmp.eq.s32.totalorder %s25, 1
      %p119 = por %p117, %p118
      %p121 = scmp.ne.s32.totalorder %s104, %s120
      %p122 = scmp.eq.s32.totalorder %s25, 0
      %p123 = por %p121, %p122
      %s125 = sadd.s32 %s124, 1
      %p128 = scmp.eq.s32.totalorder %s19, 1
      %p129 = scmp.ne.s32.totalorder %s124, %s126
      %p130 = scmp.eq.s32.totalorder %s19, 0
      %p131 = por %p129, %p130
      %p132 = scmp.ne.s32.totalorder %s124, %s126
      %p133 = scmp.eq.s32.totalorder %s24, 1
      %p134 = por %p132, %p133
      %p135 = scmp.ne.s32.totalorder %s126, %s127
      %p136 = scmp.eq.s32.totalorder %s24, 0
      %p137 = por %p135, %p136
      %p138 = scmp.ne.s32.totalorder %s126, %s127
      %p139 = scmp.eq.s32.totalorder %s25, 1
      %p140 = por %p138, %p139
      %p142 = scmp.ne.s32.totalorder %s127, %s141
      %p143 = scmp.eq.s32.totalorder %s25, 0
      %p144 = por %p142, %p143
      %s145 = ssub.s32 %s26, %s38
      %p146 = scmp.eq.s32.totalorder %s145, 0
      %s148 = sadd.s32 %s147, 1
      %s149 = scalar_select %p146, %s147, %s148
      %p152 = pneg %p146
      %p153 = scmp.eq.s32.totalorder %s19, 1
      %p154 = por %p152, %p153
      %p155 = scmp.ne.s32.totalorder %s147, %s150
      %p156 = scmp.eq.s32.totalorder %s19, 0
      %p157 = por %p155, %p156
      %p158 = scmp.ne.s32.totalorder %s147, %s150
      %p159 = scmp.eq.s32.totalorder %s24, 1
      %p160 = por %p158, %p159
      %p161 = scmp.ne.s32.totalorder %s150, %s151
      %p162 = scmp.eq.s32.totalorder %s24, 0
      %p163 = por %p161, %p162
      %p164 = scmp.ne.s32.totalorder %s150, %s151
      %p165 = scmp.eq.s32.totalorder %s25, 1
      %p166 = por %p164, %p165
      %p168 = scmp.ne.s32.totalorder %s151, %s167
      %p169 = scmp.eq.s32.totalorder %s25, 0
      %p170 = por %p168, %p169
      %s171 = ssub.s32 %s26, %s38
      %p172 = scmp.eq.s32.totalorder %s171, 0
      %s174 = sadd.s32 %s173, 1
      %s175 = scalar_select %p172, %s173, %s174
      %p178 = pneg %p172
      %p179 = scmp.eq.s32.totalorder %s19, 1
      %p180 = por %p178, %p179
      %p181 = scmp.ne.s32.totalorder %s173, %s176
      %p182 = scmp.eq.s32.totalorder %s19, 0
      %p183 = por %p181, %p182
      %p184 = scmp.ne.s32.totalorder %s173, %s176
      %p185 = scmp.eq.s32.totalorder %s24, 1
      %p186 = por %p184, %p185
      %p187 = scmp.ne.s32.totalorder %s176, %s177
      %p188 = scmp.eq.s32.totalorder %s24, 0
      %p189 = por %p187, %p188
      %p190 = scmp.ne.s32.totalorder %s176, %s177
      %p191 = scmp.eq.s32.totalorder %s25, 1
      %p192 = por %p190, %p191
      %p194 = scmp.ne.s32.totalorder %s177, %s193
      %p195 = scmp.eq.s32.totalorder %s25, 0
      %p196 = por %p194, %p195
      %s197 = ssub.s32 %s26, %s38
      %p198 = scmp.eq.s32.totalorder %s197, 0
      %s200 = sadd.s32 %s199, 1
      %s201 = scalar_select %p198, %s199, %s200
      %p204 = pneg %p198
      %p205 = scmp.eq.s32.totalorder %s19, 1
      %p206 = por %p204, %p205
      %p207 = scmp.ne.s32.totalorder %s199, %s202
      %p208 = scmp.eq.s32.totalorder %s19, 0
      %p209 = por %p207, %p208
      %p210 = scmp.ne.s32.totalorder %s199, %s202
      %p211 = scmp.eq.s32.totalorder %s24, 1
      %p212 = por %p210, %p211
      %p213 = scmp.ne.s32.totalorder %s202, %s203
      %p214 = scmp.eq.s32.totalorder %s24, 0
      %p215 = por %p213, %p214
      %p216 = scmp.ne.s32.totalorder %s202, %s203
      %p217 = scmp.eq.s32.totalorder %s25, 1
      %p218 = por %p216, %p217
      %p220 = scmp.ne.s32.totalorder %s203, %s219
      %p221 = scmp.eq.s32.totalorder %s25, 0
      %p222 = por %p220, %p221
      %p223 = scmp.le.s32.totalorder 1, %s19
      %p224 = scmp.lt.s32.totalorder %s19, 3
      %p225 = pnand %p223, %p224
      %p226 = pneg %p225
      // Predicated region
      $region9: #{tpu_custom_call.1} parent=5 // pred_check
        _
      $region10: #{tpu_custom_call.1} parent=5 // pred_check_branch
        %228 = sbr.rel (%p225) target = $region12
      $region11: #{tpu_custom_call.1} parent=5 // pred_region
        %s229 = ssub.s32 %s19, 1
        // Predicated region
        $region13: #{tpu_custom_call.1} parent=11 // pred_check
          %p230 = pneg %p84
        $region14: #{tpu_custom_call.1} parent=11 // pred_check_branch
          %232 = sbr.rel (%p230) target = $region16
        $region15: #{tpu_custom_call.1} parent=11 // pred_region
          _
        $region16: #{tpu_custom_call.1} parent=11 // pred_fallthru
          _
        // Predicated region
        $region17: #{tpu_custom_call.1} parent=11 // pred_check
          %p233 = pneg %p137
        $region18: #{tpu_custom_call.1} parent=11 // pred_check_branch
          %235 = sbr.rel (%p233) target = $region20
        $region19: #{tpu_custom_call.1} parent=11 // pred_region
          _
        $region20: #{tpu_custom_call.1} parent=11 // pred_fallthru
          _
      $region12: #{tpu_custom_call.1} parent=5 // pred_fallthru
        _
      %p236 = scmp.lt.s32.totalorder %s19, 2
      // Predicated region
      $region21: #{tpu_custom_call.1} parent=5 // pred_check
        %p237 = pneg %p236
      $region22: #{tpu_custom_call.1} parent=5 // pred_check_branch
        %239 = sbr.rel (%p237) target = $region24
      $region23: #{tpu_custom_call.1} parent=5 // pred_region
        // Predicated region
        $region25: #{tpu_custom_call.1} parent=23 // pred_check
          %p240 = pneg %p57
        $region26: #{tpu_custom_call.1} parent=23 // pred_check_branch
          %242 = sbr.rel (%p240) target = $region28
        $region27: #{tpu_custom_call.1} parent=23 // pred_region
          %s243 = sadd.s32 %s26, %s27
          %p244 = scmp.lt.s32.totalorder %s243, 1
          %s245 = scalar_select %p244, %s243, 1
          %p246 = scmp.lt.s32.totalorder %s245, 1
          %s247 = scalar_select %p246, %s245, 1
          %s248 = smul.addr %s247, 8
          %s249 = scalar_lea.vmem %s0, %s248
          %s250 = sadd.s32 %s26, %s27
          %p251 = scmp.lt.s32.totalorder %s250, 1
          %s252 = scalar_select %p251, %s250, 1
        $region28: #{tpu_custom_call.1} parent=23 // pred_fallthru
          _
        // Predicated region
        $region29: #{tpu_custom_call.1} parent=23 // pred_check
          %p253 = pneg %p110
        $region30: #{tpu_custom_call.1} parent=23 // pred_check_branch
          %255 = sbr.rel (%p253) target = $region32
        $region31: #{tpu_custom_call.1} parent=23 // pred_region
          %s256 = sadd.s32 %s26, %s27
          %p257 = scmp.lt.s32.totalorder %s256, 1
          %s258 = scalar_select %p257, %s256, 1
          %p259 = scmp.lt.s32.totalorder %s258, 1
          %s260 = scalar_select %p259, %s258, 1
          %s261 = smul.addr %s260, 8
          %s262 = scalar_lea.vmem %s2, %s261
          %s263 = sadd.s32 %s26, %s27
          %p264 = scmp.lt.s32.totalorder %s263, 1
          %s265 = scalar_select %p264, %s263, 1
        $region32: #{tpu_custom_call.1} parent=23 // pred_fallthru
          _
      $region24: #{tpu_custom_call.1} parent=5 // pred_fallthru
        _
      %p266 = scmp.le.s32.totalorder 1, %s19
      %p267 = scmp.lt.s32.totalorder %s19, 3
      %p268 = pnand %p266, %p267
      %p269 = pneg %p268
      // Predicated region
      $region33: #{tpu_custom_call.1} parent=5 // pred_check
        _
      $region34: #{tpu_custom_call.1} parent=5 // pred_check_branch
        %271 = sbr.rel (%p268) target = $region36
      $region35: #{tpu_custom_call.1} parent=5 // pred_region
        %s272 = ssub.s32 %s19, 1
        %s273 = sadd.s32 %s28, %s29
        %p274 = scmp.lt.s32.totalorder %s273, 1
        %s275 = scalar_select %p274, %s273, 1
        %p276 = scmp.lt.s32.totalorder %s275, 1
        %s277 = scalar_select %p276, %s275, 1
        %s278 = smul.addr %s277, 8
        %s279 = scalar_lea.vmem %s0, %s278
        %p280 = pneg %p63
        %p281 = pneg %p60
        %p282 = pneg %p84
        %p283 = pneg %p81
        %s284 = sadd.s32 %s28, %s29
        %p285 = scmp.lt.s32.totalorder %s284, 1
        %s286 = scalar_select %p285, %s284, 1
        %p287 = scmp.lt.s32.totalorder %s286, 1
        %s288 = scalar_select %p287, %s286, 1
        %s289 = smul.addr %s288, 8
        %s290 = scalar_lea.vmem %s2, %s289
        %p291 = pneg %p116
        %p292 = pneg %p113
        %p293 = pneg %p137
        %p294 = pneg %p134
        %p295 = pneg %p163
        %p296 = pneg %p160
        %p297 = scmp.lt.s32.totalorder %s28, 1
        %s298 = scalar_select %p297, %s28, 1
        %s299 = scalar_lea.vmem %s4, %s298
        %p300 = pneg %p189
        %p301 = pneg %p186
        %s302 = sand.u32 %s176, 1
        %s303 = scalar_lea.sflag [#allocation3], %s302
        %s304 = sand.u32 %s176, 1
        %s305 = scalar_lea.vmem [#allocation2], %s304
        %p306 = pneg %p215
        %p307 = pneg %p212
        %s308 = sand.u32 %s202, 1
        %s309 = scalar_lea.sflag [#allocation5], %s308
        %s310 = sand.u32 %s202, 1
        %s311 = scalar_lea.vmem [#allocation4], %s310
        %s312 = sadd.s32 %s28, %s29
        %p313 = scmp.lt.s32.totalorder %s312, 1
        %s314 = scalar_select %p313, %s312, 1
        %p315 = scmp.lt.s32.totalorder %s314, 1
        %s316 = scalar_select %p315, %s314, 1
        %s317 = smul.addr %s316, 8
        %s318 = scalar_lea.vmem %s0, %s317
        %s319 = sadd.s32 %s28, %s29
        %p320 = scmp.lt.s32.totalorder %s319, 1
        %s321 = scalar_select %p320, %s319, 1
        %s322 = sadd.s32 %s28, %s29
        %p323 = scmp.lt.s32.totalorder %s322, 1
        %s324 = scalar_select %p323, %s322, 1
        %p325 = scmp.lt.s32.totalorder %s324, 1
        %s326 = scalar_select %p325, %s324, 1
        %s327 = smul.addr %s326, 8
        %s328 = scalar_lea.vmem %s2, %s327
        %s329 = sadd.s32 %s28, %s29
        %p330 = scmp.lt.s32.totalorder %s329, 1
        %s331 = scalar_select %p330, %s329, 1
        %p332 = scmp.lt.s32.totalorder %s28, 1
        %s333 = scalar_select %p332, %s28, 1
        %s334 = scalar_lea.vmem %s4, %s333
        %p335 = scmp.eq.s32.totalorder %s29, 0
        // Predicated region
        $region37: #{tpu_custom_call.1} parent=35 // pred_check
          %p336 = pneg %p335
        $region38: #{tpu_custom_call.1} parent=35 // pred_check_branch
          %338 = sbr.rel (%p336) target = $region40
        $region39: #{tpu_custom_call.1} parent=35 // pred_region
          %vm339 = vcmask 0
          %340 = vst.msk [vmem:[%s334] sm:$0x1] %vm339, 0.0
          %vm341 = vcmask 122880
          %342 = vst.msk [vmem:[%s305] sm:$0x1] %vm341, -inf
          %343 = vst.msk [vmem:[%s311] sm:$0x1] %vm341, 0.0
        $region40: #{tpu_custom_call.1} parent=35 // pred_fallthru
          _
        %s344 = sadd.s32 %s28, %s29
        %s345 = smul.u32 %s344, 8
        %v346 = vld [vmem:[%s318] sm:$0xff]
        %v347 = vld [vmem:[%s1] sm:$0xff]
        %v348 = vld [vmem:[%s1 + $0x8] sm:$0xff]
        %v349 = vld [vmem:[%s1 + $0x10] sm:$0xff]
        %v350 = vld [vmem:[%s1 + $0x18] sm:$0xff]
        %vm351 = vcmask 261120
        %v353 = vsel %vm351, %v346, 0
        %355 = vmatpush.msra.mxu0 0.0
        %356 = vmatpush.msra.mxu0 0.0
        %357 = vmatpush.msra.mxu0 0.0
        %358 = vmatpush.msra.mxu0 0.0
        %359 = vmatpush.msra.mxu0 0.0
        %360 = vmatpush.msra.mxu0 0.0
        %361 = vmatpush.msra.mxu0 0.0
        %362 = vmatpush.msra.mxu0 0.0
        %363 = vmatpush.msra.mxu0 0.0
        %364 = vmatpush.msra.mxu0 0.0
        %365 = vmatpush.msra.mxu0 0.0
        %366 = vmatpush.msra.mxu0 0.0
        %367 = vmatpush.msra.mxu0 %v350
        %368 = vmatpush.msra.mxu0 %v349
        %369 = vmatpush.msra.mxu0 %v348
        %370 = vmatpush.msra.mxu0 %v347
        %371 = vmatmul.f32.gmra.mxu0 %v353
        %v372 = vpop.f32.mrf.mxu0
        %v373 = vadd.f32 0.0, %v372
        %374 = vdwg.mxu0
        %v375 = vlaneseq
        %v376 = vshrl.u32 %v375, 7
        %v377 = vlaneseq
        %v378 = vand.u32 %v377, 127
        %v379 = vstv %s345
        %v380 = vadd.s32 %v376, %v379
        %vm381 = vcmp.eq.s32.totalorder %v378, %v380
        %vm382 = vcmp.lt.s32.totalorder %v380, 16
        %v383 = vld [vmem:[%s328] sm:$0xff]
        %v384 = vld [vmem:[%s3] sm:$0x1]
        %386 = vset.pattern.permute.xlu0 0
        %387 = vperm.xlu0 %386, %v383
        %v388 = vpop.permute.xlu0 %387
        %vm390 = vcmp.ge.f32.partialorder %v373, %v388
        %v392 = vperm.slane %v384, 0
        %vm394 = vcmp.ge.f32.partialorder %v373, %v392
        %vm395 = vmor %vm390, %vm381
        %vm396 = vmor %vm394, %vm381
        %vm397 = vcmask 130048
        %v398 = vsel %vm397, %v373, -inf
        %399 = vmax.xlane.f32.xlu0 %v398
        %v400 = vpop.xlane.xlu0 %399
        %v401 = vsub.f32 %v373, %v400
        %v402 = vmul.f32 %v401, 1.442695
        %v403 = vpow.pop %v402
        %v404 = vmul.f32 %v403, 0.13533528
        %v405 = vsel %vm395, %v403, %v404
        %v406 = vsel %vm397, %v405, 0.0
        %407 = vadd.xlane.f32.xlu0 %v406
        %v408 = vpop.xlane.xlu0 %407
        %v409 = vlog2.pop %v408
        %v410 = vmul.f32 %v409, 0.6931472
        %v411 = vadd.f32 %v400, %v410
        %v412 = vld [vmem:[%s334] sm:$0x1]
        %v413 = vsel %vm382, %v411, 0.0
        %vm414 = vcmask 7168
        %v415 = vsel %vm414, %v413, 0.0
        %416 = vadd.xlane.f32.xlu0 %v415
        %v417 = vpop.xlane.xlu0 %416
        %v418 = vrot.slane %v417, 4
        %v419 = vadd.f32 %v417, %v418
        %v420 = vrot.slane %v419, 2
        %v421 = vadd.f32 %v419, %v420
        %v422 = vrot.slane %v421, 1
        %v423 = vadd.f32 %v421, %v422
        %s424 = vtos %v423
        %v425 = vstv %s424
        %v426 = vadd.f32 %v412, %v425
        %vm427 = vcmask 0
        %428 = vst.msk [vmem:[%s334] sm:$0x1] %vm427, %v426
        %v429 = vsel %vm382, 1, 0
        %vm430 = vcmp.eq.s32.totalorder %v429, 1
        %v431 = vsel %vm430, %v373, -inf
        %v432 = vsel %vm397, %v431, -inf
        %v433 = vrot.slane %v432, 4
        %v434 = vmax.f32 %v432, %v433
        %v435 = vrot.slane %v434, 2
        %v436 = vmax.f32 %v434, %v435
        %v437 = vrot.slane %v436, 1
        %v438 = vmax.f32 %v436, %v437
        %v439 = vld [vmem:[%s305] sm:$0x1]
        %v440 = vmax.f32 %v439, %v438
        %v442 = vperm.slane %v440, 0
        %v444 = vsub.f32 %v373, %v442
        %v445 = vmul.f32 %v444, 1.442695
        %v446 = vpow.pop %v445
        %v447 = vmul.f32 %v446, 0.13533528
        %v448 = vsel %vm396, %v446, %v447
        %v449 = vsel %vm430, %v448, 0.0
        %v450 = vld [vmem:[%s311] sm:$0x1]
        %v451 = vsub.f32 %v439, %v440
        %v452 = vmul.f32 %v451, 1.442695
        %v453 = vpow.pop %v452
        %v454 = vmul.f32 %v450, %v453
        %v455 = vsel %vm397, %v449, 0.0
        %v456 = vrot.slane %v455, 4
        %v457 = vadd.f32 %v455, %v456
        %v458 = vrot.slane %v457, 2
        %v459 = vadd.f32 %v457, %v458
        %v460 = vrot.slane %v459, 1
        %v461 = vadd.f32 %v459, %v460
        %v462 = vadd.f32 %v454, %v461
        %vm463 = vcmask 122880
        %464 = vst.msk [vmem:[%s311] sm:$0x1] %vm463, %v462
        %465 = vst.msk [vmem:[%s305] sm:$0x1] %vm463, %v440
        %p466 = scmp.lt.s32.totalorder %s28, 1
        %s467 = scalar_select %p466, %s28, 1
        %s468 = scalar_lea.vmem %s4, %s467
        %s469 = sand.u32 %s176, 1
        %s470 = scalar_lea.sflag [#allocation3], %s469
        %s471 = sand.u32 %s176, 1
        %s472 = scalar_lea.vmem [#allocation2], %s471
        %s473 = sand.u32 %s202, 1
        %s474 = scalar_lea.sflag [#allocation5], %s473
        %s475 = sand.u32 %s202, 1
        %s476 = scalar_lea.vmem [#allocation4], %s475
        // Predicated region
        $region41: #{tpu_custom_call.1} parent=35 // pred_check
          %p477 = pneg %p160
        $region42: #{tpu_custom_call.1} parent=35 // pred_check_branch
          %479 = sbr.rel (%p477) target = $region44
        $region43: #{tpu_custom_call.1} parent=35 // pred_region
          _
        $region44: #{tpu_custom_call.1} parent=35 // pred_fallthru
          _
        // Predicated region
        $region45: #{tpu_custom_call.1} parent=35 // pred_check
          %p480 = pneg %p186
        $region46: #{tpu_custom_call.1} parent=35 // pred_check_branch
          %482 = sbr.rel (%p480) target = $region48
        $region47: #{tpu_custom_call.1} parent=35 // pred_region
          %484 = vsyncadd %s470, 0
          %s485 = scalar_lea.hbm %s5, %s28
          %s487 = sshll.u32 %s472, 4
          %s488 = int_to_ptr.vmem [resolvable:$true] %s487
          %s489 = sshll.u32 %s485, 4
          %s490 = int_to_ptr.hbm [resolvable:$true] %s489
          %492 = dma.vmem_to_hbm [thread:$0]  %s488, 16, %s490, %s470
        $region48: #{tpu_custom_call.1} parent=35 // pred_fallthru
          _
        // Predicated region
        $region49: #{tpu_custom_call.1} parent=35 // pred_check
          %p493 = pneg %p212
        $region50: #{tpu_custom_call.1} parent=35 // pred_check_branch
          %495 = sbr.rel (%p493) target = $region52
        $region51: #{tpu_custom_call.1} parent=35 // pred_region
          %497 = vsyncadd %s474, 0
          %s498 = scalar_lea.hbm %s6, %s28
          %s500 = sshll.u32 %s476, 4
          %s501 = int_to_ptr.vmem [resolvable:$true] %s500
          %s502 = sshll.u32 %s498, 4
          %s503 = int_to_ptr.hbm [resolvable:$true] %s502
          %505 = dma.vmem_to_hbm [thread:$0]  %s501, 16, %s503, %s474
        $region52: #{tpu_custom_call.1} parent=35 // pred_fallthru
          _
      $region36: #{tpu_custom_call.1} parent=5 // pred_fallthru
        _
      %p506 = scmp.le.s32.totalorder 2, %s19
      // Predicated region
      $region53: #{tpu_custom_call.1} parent=5 // pred_check
        %p507 = pneg %p506
      $region54: #{tpu_custom_call.1} parent=5 // pred_check_branch
        %509 = sbr.rel (%p507) target = $region56
      $region55: #{tpu_custom_call.1} parent=5 // pred_region
        %s510 = ssub.s32 %s19, 2
        // Predicated region
        $region57: #{tpu_custom_call.1} parent=55 // pred_check
          %p511 = pneg %p166
        $region58: #{tpu_custom_call.1} parent=55 // pred_check_branch
          %513 = sbr.rel (%p511) target = $region60
        $region59: #{tpu_custom_call.1} parent=55 // pred_region
          %p514 = scmp.lt.s32.totalorder %s30, 1
          %s515 = scalar_select %p514, %s30, 1
          %s516 = scalar_lea.vmem %s4, %s515
        $region60: #{tpu_custom_call.1} parent=55 // pred_fallthru
          _
        // Predicated region
        $region61: #{tpu_custom_call.1} parent=55 // pred_check
          %p517 = pneg %p192
        $region62: #{tpu_custom_call.1} parent=55 // pred_check_branch
          %519 = sbr.rel (%p517) target = $region64
        $region63: #{tpu_custom_call.1} parent=55 // pred_region
          %s520 = sand.u32 %s177, 1
          %s521 = scalar_lea.sflag [#allocation3], %s520
          %s522 = sand.u32 %s177, 1
          %s523 = scalar_lea.vmem [#allocation2], %s522
          %525 = dma.done %s521, 16
        $region64: #{tpu_custom_call.1} parent=55 // pred_fallthru
          _
        // Predicated region
        $region65: #{tpu_custom_call.1} parent=55 // pred_check
          %p526 = pneg %p218
        $region66: #{tpu_custom_call.1} parent=55 // pred_check_branch
          %528 = sbr.rel (%p526) target = $region68
        $region67: #{tpu_custom_call.1} parent=55 // pred_region
          %s529 = sand.u32 %s203, 1
          %s530 = scalar_lea.sflag [#allocation5], %s529
          %s531 = sand.u32 %s203, 1
          %s532 = scalar_lea.vmem [#allocation4], %s531
          %534 = dma.done %s530, 16
        $region68: #{tpu_custom_call.1} parent=55 // pred_fallthru
          _
      $region56: #{tpu_custom_call.1} parent=5 // pred_fallthru
        _
    $region6: #{tpu_custom_call.1} parent=1 // loop_footer
      %s23 = sadd.s32 1, %s19
    $region7: #{tpu_custom_call.1} parent=1 // loop_footer_branch
      %18 = sbr.rel target = $region3
    $region8: #{tpu_custom_call.1} parent=1 // loop_exit
      _
    %535 = vsyncpa [#allocation3], 1
    %s536 = scalar_lea.sflag [#allocation3], 1
    %537 = vsyncpa %s536, 1
    %538 = vsyncpa [#allocation5], 1
    %s539 = scalar_lea.sflag [#allocation5], 1
    %540 = vsyncpa %s539, 1

</llo_original>
